<compile_context>
chip_gen: v6e
topology: v6e:2x2x1
jax: 0.10.0
libtpu: 0.0.40
codegen_flags: <defaults>
</compile_context>

<pallas_src>
import jax
import jax.numpy as jnp
import numpy as np
from jax.experimental import pallas as pl
from jax.experimental.pallas import tpu as pltpu


def _round_up(v, m):
    return (v + m - 1) // m * m


def _patch_embed_kernel(lhs_ref, w_ref, b_ref, o_ref):
    # lhs_ref: (TM, K)   im2col'ed patches (rows = tile of N*T*n_patches)
    # w_ref  : (K, TE)   projection weights
    # b_ref  : (1, TE)   bias
    # o_ref  : (TM, TE)  lane-dense output tile
    o_ref[...] = (
        jnp.dot(lhs_ref[...], w_ref[...], preferred_element_type=jnp.float32)
        + b_ref[...]
    ).astype(o_ref.dtype)


def patch_embed_events(x, weight, bias, patch_size, *, tm=256, te_cap=512):
    """x: (N, T, H, W) f32, weight: (E, 1, p, p), bias: (E,) ->
       (N, T * n_patches, E) f32."""
    N, T, H, W = x.shape
    p = patch_size
    E = weight.shape[0]
    assert H % p == 0 and W % p == 0
    hp, wp = H // p, W // p
    n_patches = hp * wp
    K = p * p

    # ---- im2col in the wrapper: lane-dense (R, K) LHS, R = N*T*n_patches ----
    lhs = x.reshape(N, T, hp, p, wp, p).transpose(0, 1, 2, 4, 3, 5)
    lhs = lhs.reshape(N * T * n_patches, K)
    R = lhs.shape[0]

    # Conv2d weight (E, 1, p, p) -> matmul weight (K, E); same row-major
    # (p_row, p_col) flattening order as the patch extraction above.
    w = weight.reshape(E, K).T
    b = bias.reshape(1, E)

    # ---- pad so tiles are (8, 128)-aligned; lane dim = embed_dim ----------
    TM = min(tm, _round_up(R, 8))
    R_pad = _round_up(R, TM)
    E_pad = _round_up(E, 128)
    TE = next(t for t in (te_cap, 256, 128) if E_pad % t == 0)

    lhs = jnp.pad(lhs, ((0, R_pad - R), (0, 0)))
    w = jnp.pad(w, ((0, 0), (0, E_pad - E)))
    b = jnp.pad(b, ((0, 0), (0, E_pad - E)))

    grid = (R_pad // TM, E_pad // TE)
    out = pl.pallas_call(
        _patch_embed_kernel,
        out_shape=jax.ShapeDtypeStruct((R_pad, E_pad), jnp.float32),
        grid=grid,
        in_specs=[
            pl.BlockSpec((TM, K), lambda i, j: (i, 0)),
            pl.BlockSpec((K, TE), lambda i, j: (0, j)),
            pl.BlockSpec((1, TE), lambda i, j: (0, j)),
        ],
        out_specs=pl.BlockSpec((TM, TE), lambda i, j: (i, j)),
        compiler_params=pltpu.CompilerParams(
            dimension_semantics=("parallel", "parallel")),
    )(lhs, w, b)

    out = out[:R, :E].reshape(N, T * n_patches, E)
    return out


def reference_jax(x, weight, bias, patch_size):
    """Pure-JAX replica of the PyTorch forward (strided conv per timestep)."""
    N, T, H, W = x.shape
    E = weight.shape[0]
    p = patch_size
    w_hwio = jnp.transpose(weight, (2, 3, 1, 0))          # (p, p, 1, E)
    outs = []
    for t in range(T):
        xt = x[:, t, :, :][..., None]                     # NHWC, 1 channel
        y = jax.lax.conv_general_dilated(
            xt, w_hwio, window_strides=(p, p), padding="VALID",
            dimension_numbers=("NHWC", "HWIO", "NHWC"))   # (N, hp, wp, E)
        y = y + bias.reshape(1, 1, 1, E)
        outs.append(y.reshape(N, -1, E))                  # (N, n_patches, E)
    return jnp.concatenate(outs, axis=1)                  # (N, T*n_patches, E)


if __name__ == "__main__":
    key = jax.random.PRNGKey(0)
    key, kx, kw, kb = jax.random.split(key, 4)

    N, T = 2, 5          # seq_len = 5, matching the module's 5 time slots
    H = W = 16           # img_size
    P = 4                # patch_size -> n_patches = 16
    E = 128              # embed_dim (lane-dense; 768 in the real module)

    x = jax.random.normal(kx, (N, T, H, W), jnp.float32)
    fan_in = 1 * P * P   # in_chans = 1: each timestep is a 1-channel image
    bound = 1.0 / np.sqrt(fan_in)
    weight = jax.random.uniform(kw, (E, 1, P, P), jnp.float32, -bound, bound)
    bias = jax.random.uniform(kb, (E,), jnp.float32, -bound, bound)

    out = patch_embed_events(x, weight, bias, P)
    out = jax.block_until_ready(out)

    n_patches = (H // P) * (W // P)
    assert out.shape == (N, T * n_patches, E)

    ref = jax.block_until_ready(reference_jax(x, weight, bias, P))
    # Loose tolerance: default-precision MXU matmul (kernel) vs XLA conv (ref).
    assert jnp.allclose(out, ref, atol=1e-2, rtol=1e-2), (
        float(jnp.max(jnp.abs(out - ref))))

    print("KERNEL_OK")
</pallas_src>

<mosaic_0001>
module attributes {stable_mosaic.version = 11 : i64} {
  func.func @_patch_embed_kernel(%arg0: i32, %arg1: i32, %arg2: memref<160x16xf32, #tpu.memory_space<vmem>>, %arg3: memref<16x128xf32, #tpu.memory_space<vmem>>, %arg4: memref<1x128xf32, #tpu.memory_space<vmem>>, %arg5: memref<160x128xf32, #tpu.memory_space<vmem>>) attributes {dimension_semantics = [#tpu.dimension_semantics<parallel>, #tpu.dimension_semantics<parallel>], iteration_bounds = array<i64: 1, 1>, scalar_prefetch = 0 : i64, scratch_operands = 0 : i64, tpu.core_type = #tpu.core_type<tc>, window_params = [{transform_indices = @transform_0, window_bounds = array<i64: 160, 16>}, {transform_indices = @transform_1, window_bounds = array<i64: 16, 128>}, {transform_indices = @transform_2, window_bounds = array<i64: 1, 128>}, {transform_indices = @transform_3, window_bounds = array<i64: 160, 128>}]} {
    %c0 = arith.constant 0 : index
    %c0_0 = arith.constant 0 : index
    %0 = vector.load %arg2[%c0, %c0_0] : memref<160x16xf32, #tpu.memory_space<vmem>>, vector<160x16xf32>
    %c0_1 = arith.constant 0 : index
    %c0_2 = arith.constant 0 : index
    %1 = vector.load %arg3[%c0_1, %c0_2] : memref<16x128xf32, #tpu.memory_space<vmem>>, vector<16x128xf32>
    %cst = arith.constant dense<0.000000e+00> : vector<160x128xf32>
    %2 = tpu.matmul %0, %1, %cst {dimension_numbers = #tpu.dot_dimension_numbers<[1], [0], [0], [1], [0, 0, 1, 1], [], []>} : vector<160x16xf32>, vector<16x128xf32>, vector<160x128xf32> -> vector<160x128xf32>
    %c0_3 = arith.constant 0 : index
    %c0_4 = arith.constant 0 : index
    %3 = vector.load %arg4[%c0_3, %c0_4] : memref<1x128xf32, #tpu.memory_space<vmem>>, vector<1x128xf32>
    %4 = vector.broadcast %3 : vector<1x128xf32> to vector<160x128xf32>
    %5 = arith.addf %2, %4 : vector<160x128xf32>
    %c0_5 = arith.constant 0 : index
    %c0_6 = arith.constant 0 : index
    %6 = vector.load %arg5[%c0_5, %c0_6] : memref<160x128xf32, #tpu.memory_space<vmem>>, vector<160x128xf32>
    tpu.vector_store %arg5[%c0_5, %c0_6], %5 {strides = array<i32>} : memref<160x128xf32, #tpu.memory_space<vmem>>, vector<160x128xf32>,
    return
  }
  func.func @transform_0(%arg0: i32, %arg1: i32) -> (i32, i32) {
    %c0_i32 = arith.constant 0 : i32
    %c0_i32_0 = arith.constant 0 : i32
    return %arg0, %c0_i32 : i32, i32
  }
  func.func @transform_1(%arg0: i32, %arg1: i32) -> (i32, i32) {
    %c0_i32 = arith.constant 0 : i32
    %c0_i32_0 = arith.constant 0 : i32
    return %c0_i32, %arg1 : i32, i32
  }
  func.func @transform_2(%arg0: i32, %arg1: i32) -> (i32, i32) {
    %c0_i32 = arith.constant 0 : i32
    %c0_i32_0 = arith.constant 0 : i32
    return %c0_i32, %arg1 : i32, i32
  }
  func.func @transform_3(%arg0: i32, %arg1: i32) -> (i32, i32) {
    %c0_i32 = arith.constant 0 : i32
    return %arg0, %arg1 : i32, i32
  }
}

</mosaic_0001>

<llo_original>
// kernel: tpu_custom_call.1
$region0: #{tpu_custom_call.1}
  #allocation0 [shape = 'u32[]', space=smem, size = 0x4, offset = 0x4, fixed_abs, tag = 'smem constant byte address 0x4 - core index']
  #allocation1 [shape = 'u32[144,128]{1,0:T(1,128)}', space=vmem, size = 0x12000, scoped, tag = 'internal scratch']
  %s0 = inlined_call_operand.vmem [shape: f32[160,16], index: 0, kind: input, shape index: {}]
  %s1 = inlined_call_operand.vmem [shape: f32[16,128], index: 1, kind: input, shape index: {}]
  %s2 = inlined_call_operand.vmem [shape: f32[1,128], index: 2, kind: input, shape index: {}]
  %s3 = inlined_call_operand.hbm [shape: f32[160,128], index: 3, kind: output, shape index: {}]
  %s4 = sld [smem:[#allocation0]]
  $region22: #{tpu_custom_call.1} parent=0
    _
  %s6 = ssub.s32 1, %s4
  %s7 = scalar_select 0, %s6, %s4
  $region1: #{tpu_custom_call.1} parent=0
    #allocation2 [shape = 'u8[81920]{0}', space=vmem, size = 0x14000, scoped, tag = 'output window, operand 0, single buffered']
    #allocation3 [shape = 's32[1]{0}', space=sflag, size = 0x4, scoped, tag = 'scoped memory for tpu_custom_call.1']
    %8 = vsyncpa [#allocation3], 0
    // Predicated region
    $region2: #{tpu_custom_call.1} parent=1 // pred_check
      _
    $region3: #{tpu_custom_call.1} parent=1 // pred_check_branch
      %10 = sbr.rel (0) target = $region5
    $region4: #{tpu_custom_call.1} parent=1 // pred_region
      _
    $region5: #{tpu_custom_call.1} parent=1 // pred_fallthru
      _
    // Predicated region
    $region6: #{tpu_custom_call.1} parent=1 // pred_check
      _
    $region7: #{tpu_custom_call.1} parent=1 // pred_check_branch
      %12 = sbr.rel (0) target = $region9
    $region8: #{tpu_custom_call.1} parent=1 // pred_region
      _
    $region9: #{tpu_custom_call.1} parent=1 // pred_fallthru
      _
    // Predicated region
    $region10: #{tpu_custom_call.1} parent=1 // pred_check
      _
    $region11: #{tpu_custom_call.1} parent=1 // pred_check_branch
      %14 = sbr.rel (0) target = $region13
    $region12: #{tpu_custom_call.1} parent=1 // pred_region
      _
    $region13: #{tpu_custom_call.1} parent=1 // pred_fallthru
      _
    %v15 = vld [vmem:[%s0] sm:$0xff]
    %v16 = vld [vmem:[%s0 + $0x8] sm:$0xff]
    %v17 = vld [vmem:[%s0 + $0x10] sm:$0xff]
    %v18 = vld [vmem:[%s0 + $0x18] sm:$0xff]
    %v19 = vld [vmem:[%s0 + $0x20] sm:$0xff]
    %v20 = vld [vmem:[%s0 + $0x28] sm:$0xff]
    %v21 = vld [vmem:[%s0 + $0x30] sm:$0xff]
    %v22 = vld [vmem:[%s0 + $0x38] sm:$0xff]
    %v23 = vld [vmem:[%s0 + $0x40] sm:$0xff]
    %v24 = vld [vmem:[%s0 + $0x48] sm:$0xff]
    %v25 = vld [vmem:[%s0 + $0x50] sm:$0xff]
    %v26 = vld [vmem:[%s0 + $0x58] sm:$0xff]
    %v27 = vld [vmem:[%s0 + $0x60] sm:$0xff]
    %v28 = vld [vmem:[%s0 + $0x68] sm:$0xff]
    %v29 = vld [vmem:[%s0 + $0x70] sm:$0xff]
    %v30 = vld [vmem:[%s0 + $0x78] sm:$0xff]
    %v31 = vld [vmem:[%s0 + $0x80] sm:$0xff]
    %v32 = vld [vmem:[%s0 + $0x88] sm:$0xff]
    %v33 = vld [vmem:[%s0 + $0x90] sm:$0xff]
    %v34 = vld [vmem:[%s0 + $0x98] sm:$0xff]
    %v35 = vld [vmem:[%s1] sm:$0xff]
    %v36 = vld [vmem:[%s1 + $0x8] sm:$0xff]
    %v37 = vld [vmem:[%s2] sm:$0x1]
    %v39 = vlaneseq
    %v40 = vshrl.u32 %v39, 7
    %v41 = vsub.s32 0, %v40
    %v42 = vrot.slane %v37, %v41
    %vm44 = vcmask 130048
    %v46 = vsel %vm44, %v15, 0
    %v49 = vsel %vm44, %v16, 0
    %v52 = vsel %vm44, %v17, 0
    %v55 = vsel %vm44, %v18, 0
    %v58 = vsel %vm44, %v19, 0
    %v61 = vsel %vm44, %v20, 0
    %v64 = vsel %vm44, %v21, 0
    %v67 = vsel %vm44, %v22, 0
    %v70 = vsel %vm44, %v23, 0
    %v73 = vsel %vm44, %v24, 0
    %v76 = vsel %vm44, %v25, 0
    %v79 = vsel %vm44, %v26, 0
    %v82 = vsel %vm44, %v27, 0
    %v85 = vsel %vm44, %v28, 0
    %v88 = vsel %vm44, %v29, 0
    %v91 = vsel %vm44, %v30, 0
    %v94 = vsel %vm44, %v31, 0
    %v97 = vsel %vm44, %v32, 0
    %v100 = vsel %vm44, %v33, 0
    %v103 = vsel %vm44, %v34, 0
    %105 = vmatprep.subr.mxu0 0.0
    %106 = vmatpush1.msra.mxu0 0.0
    %107 = vmatprep.subr.mxu0 0.0
    %108 = vmatpush1.msra.mxu0 0.0
    %109 = vmatprep.subr.mxu0 0.0
    %110 = vmatpush1.msra.mxu0 0.0
    %111 = vmatprep.subr.mxu0 0.0
    %112 = vmatpush1.msra.mxu0 0.0
    %113 = vmatprep.subr.mxu0 0.0
    %114 = vmatpush1.msra.mxu0 0.0
    %115 = vmatprep.subr.mxu0 0.0
    %116 = vmatpush1.msra.mxu0 0.0
    %117 = vmatprep.subr.mxu0 0.0
    %118 = vmatpush1.msra.mxu0 0.0
    %119 = vmatprep.subr.mxu0 0.0
    %120 = vmatpush1.msra.mxu0 0.0
    %121 = vmatprep.subr.mxu0 0.0
    %122 = vmatpush1.msra.mxu0 0.0
    %123 = vmatprep.subr.mxu0 0.0
    %124 = vmatpush1.msra.mxu0 0.0
    %125 = vmatprep.subr.mxu0 0.0
    %126 = vmatpush1.msra.mxu0 0.0
    %127 = vmatprep.subr.mxu0 0.0
    %128 = vmatpush1.msra.mxu0 0.0
    %129 = vmatprep.subr.mxu0 0.0
    %130 = vmatpush1.msra.mxu0 0.0
    %131 = vmatprep.subr.mxu0 0.0
    %132 = vmatpush1.msra.mxu0 0.0
    %133 = vmatprep.subr.mxu0 0.0
    %134 = vmatpush1.msra.mxu0 %v36
    %135 = vmatprep.subr.mxu0 0.0
    %136 = vmatpush1.msra.mxu0 %v35
    %137 = vmatprep.subr.mxu0 0.0
    %138 = vmatpush2.msra.mxu0 0.0
    %139 = vmatprep.subr.mxu0 0.0
    %140 = vmatpush2.msra.mxu0 0.0
    %141 = vmatprep.subr.mxu0 0.0
    %142 = vmatpush2.msra.mxu0 0.0
    %143 = vmatprep.subr.mxu0 0.0
    %144 = vmatpush2.msra.mxu0 0.0
    %145 = vmatprep.subr.mxu0 0.0
    %146 = vmatpush2.msra.mxu0 0.0
    %147 = vmatprep.subr.mxu0 0.0
    %148 = vmatpush2.msra.mxu0 0.0
    %149 = vmatprep.subr.mxu0 0.0
    %150 = vmatpush2.msra.mxu0 0.0
    %151 = vmatprep.subr.mxu0 0.0
    %152 = vmatpush2.msra.mxu0 0.0
    %153 = vmatprep.subr.mxu0 0.0
    %154 = vmatpush2.msra.mxu0 0.0
    %155 = vmatprep.subr.mxu0 0.0
    %156 = vmatpush2.msra.mxu0 0.0
    %157 = vmatprep.subr.mxu0 0.0
    %158 = vmatpush2.msra.mxu0 0.0
    %159 = vmatprep.subr.mxu0 0.0
    %160 = vmatpush2.msra.mxu0 0.0
    %161 = vmatprep.subr.mxu0 0.0
    %162 = vmatpush2.msra.mxu0 0.0
    %163 = vmatprep.subr.mxu0 0.0
    %164 = vmatpush2.msra.mxu0 0.0
    %165 = vmatprep.subr.mxu0 0.0
    %166 = vmatpush2.msra.mxu0 0.0
    %167 = vmatprep.subr.mxu0 0.0
    %168 = vmatpush2.msra.mxu0 0.0
    %169 = vmatprep.mubr.f32.mxu0 0.0
    %170 = vmatmul.mubr.f32.gmra.mxu0 %v46
    %v171 = vpop.f32.mrf.mxu0
    %v172 = vadd.f32 %v42, %v171
    %v173 = vpop.f32.mrf.mxu0
    %174 = vmatprep.mubr.f32.mxu0 0.0
    %175 = vmatmul.mubr.f32.gmra.mxu0 %v49
    %v176 = vpop.f32.mrf.mxu0
    %v177 = vadd.f32 %v42, %v176
    %v178 = vpop.f32.mrf.mxu0
    %179 = vmatprep.mubr.f32.mxu0 0.0
    %180 = vmatmul.mubr.f32.gmra.mxu0 %v52
    %v181 = vpop.f32.mrf.mxu0
    %v182 = vadd.f32 %v42, %v181
    %v183 = vpop.f32.mrf.mxu0
    %184 = vmatprep.mubr.f32.mxu0 0.0
    %185 = vmatmul.mubr.f32.gmra.mxu0 %v55
    %v186 = vpop.f32.mrf.mxu0
    %v187 = vadd.f32 %v42, %v186
    %v188 = vpop.f32.mrf.mxu0
    %189 = vmatprep.mubr.f32.mxu0 0.0
    %190 = vmatmul.mubr.f32.gmra.mxu0 %v58
    %v191 = vpop.f32.mrf.mxu0
    %v192 = vadd.f32 %v42, %v191
    %v193 = vpop.f32.mrf.mxu0
    %194 = vmatprep.mubr.f32.mxu0 0.0
    %195 = vmatmul.mubr.f32.gmra.mxu0 %v61
    %v196 = vpop.f32.mrf.mxu0
    %v197 = vadd.f32 %v42, %v196
    %v198 = vpop.f32.mrf.mxu0
    %199 = vmatprep.mubr.f32.mxu0 0.0
    %200 = vmatmul.mubr.f32.gmra.mxu0 %v64
    %v201 = vpop.f32.mrf.mxu0
    %v202 = vadd.f32 %v42, %v201
    %v203 = vpop.f32.mrf.mxu0
    %204 = vmatprep.mubr.f32.mxu0 0.0
    %205 = vmatmul.mubr.f32.gmra.mxu0 %v67
    %v206 = vpop.f32.mrf.mxu0
    %v207 = vadd.f32 %v42, %v206
    %v208 = vpop.f32.mrf.mxu0
    %209 = vmatprep.mubr.f32.mxu0 0.0
    %210 = vmatmul.mubr.f32.gmra.mxu0 %v70
    %v211 = vpop.f32.mrf.mxu0
    %v212 = vadd.f32 %v42, %v211
    %v213 = vpop.f32.mrf.mxu0
    %214 = vmatprep.mubr.f32.mxu0 0.0
    %215 = vmatmul.mubr.f32.gmra.mxu0 %v73
    %v216 = vpop.f32.mrf.mxu0
    %v217 = vadd.f32 %v42, %v216
    %v218 = vpop.f32.mrf.mxu0
    %219 = vmatprep.mubr.f32.mxu0 0.0
    %220 = vmatmul.mubr.f32.gmra.mxu0 %v76
    %v221 = vpop.f32.mrf.mxu0
    %v222 = vadd.f32 %v42, %v221
    %v223 = vpop.f32.mrf.mxu0
    %224 = vmatprep.mubr.f32.mxu0 0.0
    %225 = vmatmul.mubr.f32.gmra.mxu0 %v79
    %v226 = vpop.f32.mrf.mxu0
    %v227 = vadd.f32 %v42, %v226
    %v228 = vpop.f32.mrf.mxu0
    %229 = vmatprep.mubr.f32.mxu0 0.0
    %230 = vmatmul.mubr.f32.gmra.mxu0 %v82
    %v231 = vpop.f32.mrf.mxu0
    %v232 = vadd.f32 %v42, %v231
    %v233 = vpop.f32.mrf.mxu0
    %234 = vmatprep.mubr.f32.mxu0 0.0
    %235 = vmatmul.mubr.f32.gmra.mxu0 %v85
    %v236 = vpop.f32.mrf.mxu0
    %v237 = vadd.f32 %v42, %v236
    %v238 = vpop.f32.mrf.mxu0
    %239 = vmatprep.mubr.f32.mxu0 0.0
    %240 = vmatmul.mubr.f32.gmra.mxu0 %v88
    %v241 = vpop.f32.mrf.mxu0
    %v242 = vadd.f32 %v42, %v241
    %v243 = vpop.f32.mrf.mxu0
    %244 = vmatprep.mubr.f32.mxu0 0.0
    %245 = vmatmul.mubr.f32.gmra.mxu0 %v91
    %v246 = vpop.f32.mrf.mxu0
    %v247 = vadd.f32 %v42, %v246
    %v248 = vpop.f32.mrf.mxu0
    %249 = vmatprep.mubr.f32.mxu0 0.0
    %250 = vmatmul.mubr.f32.gmra.mxu0 %v94
    %v251 = vpop.f32.mrf.mxu0
    %v252 = vadd.f32 %v42, %v251
    %v253 = vpop.f32.mrf.mxu0
    %254 = vmatprep.mubr.f32.mxu0 0.0
    %255 = vmatmul.mubr.f32.gmra.mxu0 %v97
    %v256 = vpop.f32.mrf.mxu0
    %v257 = vadd.f32 %v42, %v256
    %v258 = vpop.f32.mrf.mxu0
    %259 = vmatprep.mubr.f32.mxu0 0.0
    %260 = vmatmul.mubr.f32.gmra.mxu0 %v100
    %v261 = vpop.f32.mrf.mxu0
    %v262 = vadd.f32 %v42, %v261
    %v263 = vpop.f32.mrf.mxu0
    %264 = vmatprep.mubr.f32.mxu0 0.0
    %265 = vmatmul.mubr.f32.gmra.mxu0 %v103
    %v266 = vpop.f32.mrf.mxu0
    %v267 = vadd.f32 %v42, %v266
    %v268 = vpop.f32.mrf.mxu0
    %269 = vdwg.mxu0
    %270 = vst [vmem:[#allocation2] sm:$0xff] %v172
    %271 = vst [vmem:[#allocation2 + $0x8] sm:$0xff] %v177
    %272 = vst [vmem:[#allocation2 + $0x10] sm:$0xff] %v182
    %273 = vst [vmem:[#allocation2 + $0x18] sm:$0xff] %v187
    %274 = vst [vmem:[#allocation2 + $0x20] sm:$0xff] %v192
    %275 = vst [vmem:[#allocation2 + $0x28] sm:$0xff] %v197
    %276 = vst [vmem:[#allocation2 + $0x30] sm:$0xff] %v202
    %277 = vst [vmem:[#allocation2 + $0x38] sm:$0xff] %v207
    %278 = vst [vmem:[#allocation2 + $0x40] sm:$0xff] %v212
    %279 = vst [vmem:[#allocation2 + $0x48] sm:$0xff] %v217
    %280 = vst [vmem:[#allocation2 + $0x50] sm:$0xff] %v222
    %281 = vst [vmem:[#allocation2 + $0x58] sm:$0xff] %v227
    %282 = vst [vmem:[#allocation2 + $0x60] sm:$0xff] %v232
    %283 = vst [vmem:[#allocation2 + $0x68] sm:$0xff] %v237
    %284 = vst [vmem:[#allocation2 + $0x70] sm:$0xff] %v242
    %285 = vst [vmem:[#allocation2 + $0x78] sm:$0xff] %v247
    %286 = vst [vmem:[#allocation2 + $0x80] sm:$0xff] %v252
    %287 = vst [vmem:[#allocation2 + $0x88] sm:$0xff] %v257
    %288 = vst [vmem:[#allocation2 + $0x90] sm:$0xff] %v262
    %289 = vst [vmem:[#allocation2 + $0x98] sm:$0xff] %v267
    // Predicated region
    $region14: #{tpu_custom_call.1} parent=1 // pred_check
      _
    $region15: #{tpu_custom_call.1} parent=1 // pred_check_branch
      %291 = sbr.rel (0) target = $region17
    $region16: #{tpu_custom_call.1} parent=1 // pred_region
      %s293 = ssub.s32 2560, 2560
      %294 = vsyncadd [#allocation3], %s293
      %s295 = sshll.u32 [#allocation2], 4
      %s296 = int_to_ptr.vmem [resolvable:$true] %s295
      %301 = dma.vmem_to_hbm [thread:$0]  %s296, 2560, %s3, [#allocation3], 128, 128, 8
    $region17: #{tpu_custom_call.1} parent=1 // pred_fallthru
      _
    // Predicated region
    $region18: #{tpu_custom_call.1} parent=1 // pred_check
      _
    $region19: #{tpu_custom_call.1} parent=1 // pred_check_branch
      %303 = sbr.rel (0) target = $region21
    $region20: #{tpu_custom_call.1} parent=1 // pred_region
      %304 = dma.done [#allocation3], 2560
    $region21: #{tpu_custom_call.1} parent=1 // pred_fallthru
      _
    %305 = vsyncpa [#allocation3], 1

</llo_original>
